<compile_context>
chip_gen: v7x
topology: tpu7x:2x2x1
jax: 0.10.0
libtpu: 0.0.40
codegen_flags: <defaults>
</compile_context>

<pallas_src>
import jax
import jax.numpy as jnp
from jax.experimental import pallas as pl
from jax.experimental.pallas import tpu as pltpu


def channel_attention_kernel(x_ref, w1_ref, w2_ref, o_ref):
    # x_ref/o_ref: (TB, C, HWp); w1_ref: (C, Cr) pre-scaled by 1/HW; w2_ref: (Cr, C)
    x = x_ref[...]
    # Spatial sum pool (the 1/HW of the mean is folded into w1); accumulate in f32.
    pooled = jnp.sum(x.astype(jnp.float32), axis=-1)                  # (TB, C)
    # fc1 + ReLU (batched over TB rows)
    h = jnp.dot(pooled, w1_ref[...].astype(jnp.float32),
                preferred_element_type=jnp.float32)
    h = jnp.maximum(h, 0.0)                                           # (TB, Cr)
    # fc2 + sigmoid
    y = jnp.dot(h, w2_ref[...].astype(jnp.float32),
                preferred_element_type=jnp.float32)
    y = jax.nn.sigmoid(y)                                             # (TB, C)
    # Per-channel gate broadcast over spatial; multiply in f32, cast on store.
    o_ref[...] = (x.astype(jnp.float32) * y[:, :, None]).astype(o_ref.dtype)


def _pick_tb(B, C, HWp, itemsize, max_block_bytes=8 << 20):
    """Largest divisor of B whose (TB, C, HWp) slab fits the per-step budget,
    keeping >= 2 grid steps when B > 1 so both v7x TensorCores get work."""
    # TODO(synk): for very large H*W (single-row slab > budget) split the rescale
    # into spatial tiles with a separate pool+gate pass instead of one big slab.
    best = 1
    for tb in range(1, B + 1):
        if B % tb:
            continue
        if tb * C * HWp * itemsize > max_block_bytes:
            continue
        if B > 1 and (B // tb) < 2:
            continue
        best = tb
    return best


@jax.jit
def channel_attention(x, w1, w2):
    """x: (B, C, H, W); w1: (C, C//r); w2: (C//r, C).  Returns x * SE-gate(x)."""
    B, C, H, W = x.shape
    HW = H * W
    Cr = w1.shape[1]

    # Lane-dense spatial axis: pad H*W up to a multiple of 128 (zeros don't
    # change the pooled sum; padded outputs are sliced away below).
    HWp = ((HW + 127) // 128) * 128
    xf = x.reshape(B, C, HW)
    if HWp != HW:
        xf = jnp.pad(xf, ((0, 0), (0, 0), (0, HWp - HW)))

    # Fold the mean's 1/HW into the first linear so the kernel only sums.
    w1s = (w1.astype(jnp.float32) * (1.0 / HW)).astype(w1.dtype)

    itemsize = x.dtype.itemsize
    TB = _pick_tb(B, C, HWp, itemsize)
    block_bytes = TB * C * HWp * itemsize
    # in + out slabs, double-buffered, plus weights & headroom; keep under v7x's
    # 64 MiB physical VMEM while raising v5e/v6e's small default scoped limit.
    vmem_limit = int(min(48 << 20, max(16 << 20, 6 * block_bytes)))

    out = pl.pallas_call(
        channel_attention_kernel,
        out_shape=jax.ShapeDtypeStruct((B, C, HWp), x.dtype),
        grid_spec=pltpu.PrefetchScalarGridSpec(
            num_scalar_prefetch=0,
            grid=(B // TB,),
            in_specs=[
                pl.BlockSpec((TB, C, HWp), lambda b: (b, 0, 0)),
                pl.BlockSpec((C, Cr), lambda b: (0, 0)),   # full weight, replicated
                pl.BlockSpec((Cr, C), lambda b: (0, 0)),   # full weight, replicated
            ],
            out_specs=pl.BlockSpec((TB, C, HWp), lambda b: (b, 0, 0)),
        ),
        compiler_params=pltpu.CompilerParams(
            dimension_semantics=("parallel",),
            vmem_limit_bytes=vmem_limit,
        ),
        # x slab and output share shape/dtype; alias to avoid a separate HBM
        # output allocation when the caller permits in-place update.
        input_output_aliases={0: 0},
    )(xf, w1s, w2)

    return out[:, :, :HW].reshape(B, C, H, W)


def reference(x, w1, w2):
    pooled = jnp.mean(x, axis=(2, 3))                       # (B, C)
    h = jnp.maximum(pooled @ w1, 0.0)                       # (B, Cr)
    y = jax.nn.sigmoid(h @ w2)                              # (B, C)
    return x * y[:, :, None, None]


if __name__ == "__main__":
    reduction_ratio = 16
    root_key = jax.random.PRNGKey(0)

    def run_case(case_key, B, C, H, W):
        Cr = C // reduction_ratio
        kx, k1, k2 = jax.random.split(case_key, 3)
        x = jax.random.normal(kx, (B, C, H, W), dtype=jnp.float32)

        # Deterministic init mirroring nn.Linear default (+/- 1/sqrt(fan_in)), no bias.
        bound1 = 1.0 / jnp.sqrt(jnp.float32(C))
        bound2 = 1.0 / jnp.sqrt(jnp.float32(Cr))
        # PyTorch Linear weight is (out, in); stored transposed (in, out) for y = x @ W.
        w1 = jax.random.uniform(k1, (C, Cr), jnp.float32, -bound1, bound1)
        w2 = jax.random.uniform(k2, (Cr, C), jnp.float32, -bound2, bound2)

        # Compute reference before the kernel (kernel may alias/donate its input slab).
        ref = jax.block_until_ready(reference(x, w1, w2))

        out = jax.block_until_ready(channel_attention(x, w1, w2))
        assert out.shape == (B, C, H, W)
        assert jnp.allclose(out, ref, atol=1e-5, rtol=1e-5), \
            f"mismatch vs reference for shape {(B, C, H, W)}"

    k0, k1 = jax.random.split(root_key)
    run_case(k0, 2, 32, 16, 16)   # HW = 256: already lane-dense
    run_case(k1, 2, 32, 14, 14)   # HW = 196: exercises zero-pad to 256 path

    print("KERNEL_OK")
</pallas_src>

<mosaic_0001>
module attributes {stable_mosaic.version = 11 : i64} {
  func.func @channel_attention_kernel(%arg0: i32, %arg1: memref<1x32x256xf32, #tpu.memory_space<vmem>>, %arg2: memref<32x2xf32, #tpu.memory_space<vmem>>, %arg3: memref<2x32xf32, #tpu.memory_space<vmem>>, %arg4: memref<1x32x256xf32, #tpu.memory_space<vmem>>) attributes {dimension_semantics = [#tpu.dimension_semantics<parallel>], iteration_bounds = array<i64: 2>, scalar_prefetch = 0 : i64, scratch_operands = 0 : i64, tpu.core_type = #tpu.core_type<tc>, window_params = [{transform_indices = @transform_0, window_bounds = array<i64: 1, 32, 256>}, {pipeline_mode = #tpu.pipeline_mode<synchronous>, transform_indices = @transform_1, window_bounds = array<i64: 32, 2>}, {pipeline_mode = #tpu.pipeline_mode<synchronous>, transform_indices = @transform_2, window_bounds = array<i64: 2, 32>}, {transform_indices = @transform_3, window_bounds = array<i64: 1, 32, 256>}]} {
    %c0 = arith.constant 0 : index
    %c0_0 = arith.constant 0 : index
    %c0_1 = arith.constant 0 : index
    %0 = vector.load %arg1[%c0, %c0_0, %c0_1] : memref<1x32x256xf32, #tpu.memory_space<vmem>>, vector<1x32x256xf32>
    %cst = arith.constant dense<0.000000e+00> : vector<1x32xf32>
    %1 = vector.multi_reduction <add>, %0, %cst [2] : vector<1x32x256xf32> to vector<1x32xf32>
    %c0_2 = arith.constant 0 : index
    %c0_3 = arith.constant 0 : index
    %2 = vector.load %arg2[%c0_2, %c0_3] : memref<32x2xf32, #tpu.memory_space<vmem>>, vector<32x2xf32>
    %cst_4 = arith.constant dense<0.000000e+00> : vector<1x2xf32>
    %3 = tpu.matmul %1, %2, %cst_4 {dimension_numbers = #tpu.dot_dimension_numbers<[1], [0], [0], [1], [0, 0, 1, 1], [], []>} : vector<1x32xf32>, vector<32x2xf32>, vector<1x2xf32> -> vector<1x2xf32>
    %cst_5 = arith.constant 0.000000e+00 : f32
    %4 = vector.broadcast %cst_5 : f32 to vector<1x2xf32>
    %5 = arith.maximumf %3, %4 : vector<1x2xf32>
    %c0_6 = arith.constant 0 : index
    %c0_7 = arith.constant 0 : index
    %6 = vector.load %arg3[%c0_6, %c0_7] : memref<2x32xf32, #tpu.memory_space<vmem>>, vector<2x32xf32>
    %cst_8 = arith.constant dense<0.000000e+00> : vector<1x32xf32>
    %7 = tpu.matmul %5, %6, %cst_8 {dimension_numbers = #tpu.dot_dimension_numbers<[1], [0], [0], [1], [0, 0, 1, 1], [], []>} : vector<1x2xf32>, vector<2x32xf32>, vector<1x32xf32> -> vector<1x32xf32>
    %8 = arith.negf %7 : vector<1x32xf32>
    %9 = math.exp %8 : vector<1x32xf32>
    %cst_9 = arith.constant 1.000000e+00 : f32
    %10 = vector.broadcast %cst_9 : f32 to vector<1x32xf32>
    %11 = arith.addf %10, %9 : vector<1x32xf32>
    %12 = arith.divf %10, %11 : vector<1x32xf32>
    %13 = vector.shape_cast %12 : vector<1x32xf32> to vector<1x32x1xf32>
    %14 = vector.broadcast %13 : vector<1x32x1xf32> to vector<1x32x256xf32>
    %15 = arith.mulf %0, %14 : vector<1x32x256xf32>
    %c0_10 = arith.constant 0 : index
    %c0_11 = arith.constant 0 : index
    %c0_12 = arith.constant 0 : index
    %16 = vector.load %arg4[%c0_10, %c0_11, %c0_12] : memref<1x32x256xf32, #tpu.memory_space<vmem>>, vector<1x32x256xf32>
    tpu.vector_store %arg4[%c0_10, %c0_11, %c0_12], %15 {strides = array<i32>} : memref<1x32x256xf32, #tpu.memory_space<vmem>>, vector<1x32x256xf32>,
    return
  }
  func.func @transform_0(%arg0: i32) -> (i32, i32, i32) {
    %c0_i32 = arith.constant 0 : i32
    %c0_i32_0 = arith.constant 0 : i32
    %c0_i32_1 = arith.constant 0 : i32
    return %arg0, %c0_i32, %c0_i32_0 : i32, i32, i32
  }
  func.func @transform_1(%arg0: i32) -> (i32, i32) {
    %c0_i32 = arith.constant 0 : i32
    %c0_i32_0 = arith.constant 0 : i32
    %c0_i32_1 = arith.constant 0 : i32
    return %c0_i32, %c0_i32_0 : i32, i32
  }
  func.func @transform_2(%arg0: i32) -> (i32, i32) {
    %c0_i32 = arith.constant 0 : i32
    %c0_i32_0 = arith.constant 0 : i32
    %c0_i32_1 = arith.constant 0 : i32
    return %c0_i32, %c0_i32_0 : i32, i32
  }
  func.func @transform_3(%arg0: i32) -> (i32, i32, i32) {
    %c0_i32 = arith.constant 0 : i32
    %c0_i32_0 = arith.constant 0 : i32
    %c0_i32_1 = arith.constant 0 : i32
    return %arg0, %c0_i32, %c0_i32_0 : i32, i32, i32
  }
}

</mosaic_0001>

<llo_original>
// kernel: channel_attention.1
$region0: #{channel_attention.1}
  #allocation0 [shape = 'u32[]', space=smem, size = 0x4, offset = 0x4, fixed_abs, tag = 'smem constant byte address 0x4 - core index']
  #allocation1 [shape = 'u32[144,128]{1,0:T(1,128)}', space=vmem, size = 0x12000, scoped, tag = 'internal scratch']
  %s0 = inlined_call_operand.vmem [shape: f32[2,32,256], index: 0, kind: input, shape index: {}, may-alias: {0,3}]
  %s1 = inlined_call_operand.vmem [shape: f32[32,2], index: 1, kind: input, shape index: {}]
  %s2 = inlined_call_operand.vmem [shape: f32[2,32], index: 2, kind: input, shape index: {}]
  %s3 = inlined_call_operand.vmem [shape: f32[2,32,256], index: 3, kind: output, shape index: {}, may-alias: {0,3}]
  %s4 = sld [smem:[#allocation0]]
  $region45: #{channel_attention.1} parent=0
    _
  %s6 = ssub.s32 1, %s4
  %s7 = scalar_select 0, %s6, %s4
  loop: start=0, step=1, limit=4
  $region2: #{channel_attention.1} parent=0 // loop_pre_header
    _
  $region3: #{channel_attention.1} parent=0 // loop_header
    %s9 = sphi 0, %s13
    %p10 = scmp.ge.s32.totalorder %s9, 4
    %s19 = sphi 0, %s21
    %s22 = sphi 0, %s19
    %s23 = sphi 0, %s22
    %s39 = sphi 0, %s23
    %s43 = sphi 0, %s43
    %s45 = sphi 0, %s43
    %s46 = sphi 0, %s45
    %s60 = sphi 0, %s46
    %s64 = sphi 0, %s64
    %s66 = sphi 0, %s64
    %s67 = sphi 0, %s66
    %s81 = sphi 0, %s67
    %s87 = sphi 0, %s89
    %s90 = sphi 0, %s87
    %s91 = sphi 0, %s90
    %s107 = sphi 0, %s91
  $region4: #{channel_attention.1} parent=0 // loop_header_branch
    %12 = sbr.rel (%p10) target = $region8
  $region5: #{channel_attention.1} parent=0 // loop_body
    %s14 = ssub.s32 %s9, 1
    %s15 = ssub.s32 %s9, 2
    %s16 = sadd.s32 %s9, 1
    %s17 = ssub.s32 %s9, %s16
    %p18 = scmp.eq.s32.totalorder %s17, 0
    %s20 = sadd.s32 %s19, 1
    %s21 = scalar_select %p18, %s19, %s20
    %p24 = pneg %p18
    %p25 = scmp.eq.s32.totalorder %s9, 1
    %p26 = por %p24, %p25
    %p27 = scmp.ne.s32.totalorder %s19, %s22
    %p28 = scmp.eq.s32.totalorder %s9, 0
    %p29 = por %p27, %p28
    %p30 = scmp.ne.s32.totalorder %s19, %s22
    %p31 = scmp.eq.s32.totalorder %s14, 1
    %p32 = por %p30, %p31
    %p33 = scmp.ne.s32.totalorder %s22, %s23
    %p34 = scmp.eq.s32.totalorder %s14, 0
    %p35 = por %p33, %p34
    %p36 = scmp.ne.s32.totalorder %s22, %s23
    %p37 = scmp.eq.s32.totalorder %s15, 1
    %p38 = por %p36, %p37
    %p40 = scmp.ne.s32.totalorder %s23, %s39
    %p41 = scmp.eq.s32.totalorder %s15, 0
    %p42 = por %p40, %p41
    %s44 = sadd.s32 %s43, 1
    %p47 = scmp.eq.s32.totalorder %s9, 1
    %p48 = scmp.ne.s32.totalorder %s43, %s45
    %p49 = scmp.eq.s32.totalorder %s9, 0
    %p50 = por %p48, %p49
    %p51 = scmp.ne.s32.totalorder %s43, %s45
    %p52 = scmp.eq.s32.totalorder %s14, 1
    %p53 = por %p51, %p52
    %p54 = scmp.ne.s32.totalorder %s45, %s46
    %p55 = scmp.eq.s32.totalorder %s14, 0
    %p56 = por %p54, %p55
    %p57 = scmp.ne.s32.totalorder %s45, %s46
    %p58 = scmp.eq.s32.totalorder %s15, 1
    %p59 = por %p57, %p58
    %p61 = scmp.ne.s32.totalorder %s46, %s60
    %p62 = scmp.eq.s32.totalorder %s15, 0
    %p63 = por %p61, %p62
    %s65 = sadd.s32 %s64, 1
    %p68 = scmp.eq.s32.totalorder %s9, 1
    %p69 = scmp.ne.s32.totalorder %s64, %s66
    %p70 = scmp.eq.s32.totalorder %s9, 0
    %p71 = por %p69, %p70
    %p72 = scmp.ne.s32.totalorder %s64, %s66
    %p73 = scmp.eq.s32.totalorder %s14, 1
    %p74 = por %p72, %p73
    %p75 = scmp.ne.s32.totalorder %s66, %s67
    %p76 = scmp.eq.s32.totalorder %s14, 0
    %p77 = por %p75, %p76
    %p78 = scmp.ne.s32.totalorder %s66, %s67
    %p79 = scmp.eq.s32.totalorder %s15, 1
    %p80 = por %p78, %p79
    %p82 = scmp.ne.s32.totalorder %s67, %s81
    %p83 = scmp.eq.s32.totalorder %s15, 0
    %p84 = por %p82, %p83
    %s85 = ssub.s32 %s9, %s16
    %p86 = scmp.eq.s32.totalorder %s85, 0
    %s88 = sadd.s32 %s87, 1
    %s89 = scalar_select %p86, %s87, %s88
    %p92 = pneg %p86
    %p93 = scmp.eq.s32.totalorder %s9, 1
    %p94 = por %p92, %p93
    %p95 = scmp.ne.s32.totalorder %s87, %s90
    %p96 = scmp.eq.s32.totalorder %s9, 0
    %p97 = por %p95, %p96
    %p98 = scmp.ne.s32.totalorder %s87, %s90
    %p99 = scmp.eq.s32.totalorder %s14, 1
    %p100 = por %p98, %p99
    %p101 = scmp.ne.s32.totalorder %s90, %s91
    %p102 = scmp.eq.s32.totalorder %s14, 0
    %p103 = por %p101, %p102
    %p104 = scmp.ne.s32.totalorder %s90, %s91
    %p105 = scmp.eq.s32.totalorder %s15, 1
    %p106 = por %p104, %p105
    %p108 = scmp.ne.s32.totalorder %s91, %s107
    %p109 = scmp.eq.s32.totalorder %s15, 0
    %p110 = por %p108, %p109
    %p111 = scmp.le.s32.totalorder 1, %s9
    %p112 = scmp.lt.s32.totalorder %s9, 3
    %p113 = pnand %p111, %p112
    %p114 = pneg %p113
    // Predicated region
    $region9: #{channel_attention.1} parent=5 // pred_check
      _
    $region10: #{channel_attention.1} parent=5 // pred_check_branch
      %116 = sbr.rel (%p113) target = $region12
    $region11: #{channel_attention.1} parent=5 // pred_region
      %s117 = ssub.s32 %s9, 1
      // Predicated region
      $region13: #{channel_attention.1} parent=11 // pred_check
        %p118 = pneg %p56
      $region14: #{channel_attention.1} parent=11 // pred_check_branch
        %120 = sbr.rel (%p118) target = $region16
      $region15: #{channel_attention.1} parent=11 // pred_region
        _
      $region16: #{channel_attention.1} parent=11 // pred_fallthru
        _
      // Predicated region
      $region17: #{channel_attention.1} parent=11 // pred_check
        %p121 = pneg %p77
      $region18: #{channel_attention.1} parent=11 // pred_check_branch
        %123 = sbr.rel (%p121) target = $region20
      $region19: #{channel_attention.1} parent=11 // pred_region
        _
      $region20: #{channel_attention.1} parent=11 // pred_fallthru
        _
    $region12: #{channel_attention.1} parent=5 // pred_fallthru
      _
    %p124 = scmp.lt.s32.totalorder %s9, 2
    // Predicated region
    $region21: #{channel_attention.1} parent=5 // pred_check
      %p125 = pneg %p124
    $region22: #{channel_attention.1} parent=5 // pred_check_branch
      %127 = sbr.rel (%p125) target = $region24
    $region23: #{channel_attention.1} parent=5 // pred_region
      // Predicated region
      $region25: #{channel_attention.1} parent=23 // pred_check
        %p128 = pneg %p29
      $region26: #{channel_attention.1} parent=23 // pred_check_branch
        %130 = sbr.rel (%p128) target = $region28
      $region27: #{channel_attention.1} parent=23 // pred_region
        %p131 = scmp.lt.s32.totalorder %s9, 1
        %s132 = scalar_select %p131, %s9, 1
        %s133 = smul.addr %s132, 8
        %s134 = smul.addr %s133, 8
        %s135 = scalar_lea.vmem %s0, %s134
      $region28: #{channel_attention.1} parent=23 // pred_fallthru
        _
    $region24: #{channel_attention.1} parent=5 // pred_fallthru
      _
    %p136 = scmp.le.s32.totalorder 1, %s9
    %p137 = scmp.lt.s32.totalorder %s9, 3
    %p138 = pnand %p136, %p137
    %p139 = pneg %p138
    // Predicated region
    $region29: #{channel_attention.1} parent=5 // pred_check
      _
    $region30: #{channel_attention.1} parent=5 // pred_check_branch
      %141 = sbr.rel (%p138) target = $region32
    $region31: #{channel_attention.1} parent=5 // pred_region
      %s142 = ssub.s32 %s9, 1
      %p143 = scmp.lt.s32.totalorder %s14, 1
      %s144 = scalar_select %p143, %s14, 1
      %s145 = smul.addr %s144, 8
      %s146 = smul.addr %s145, 8
      %s147 = scalar_lea.vmem %s0, %s146
      %p148 = pneg %p35
      %p149 = pneg %p32
      %p150 = pneg %p56
      %p151 = pneg %p53
      %p152 = pneg %p77
      %p153 = pneg %p74
      %p154 = pneg %p103
      %p155 = pneg %p100
      %p156 = scmp.lt.s32.totalorder %s14, 1
      %s157 = scalar_select %p156, %s14, 1
      %s158 = smul.addr %s157, 8
      %s159 = smul.addr %s158, 8
      %s160 = scalar_lea.vmem %s3, %s159
      %p161 = scmp.lt.s32.totalorder %s14, 1
      %s162 = scalar_select %p161, %s14, 1
      %s163 = smul.addr %s162, 8
      %s164 = smul.addr %s163, 8
      %s165 = scalar_lea.vmem %s0, %s164
      %p166 = scmp.lt.s32.totalorder %s14, 1
      %s167 = scalar_select %p166, %s14, 1
      %s168 = smul.addr %s167, 8
      %s169 = smul.addr %s168, 8
      %s170 = scalar_lea.vmem %s3, %s169
      %v171 = vld [vmem:[%s165] sm:$0xff]
      %v172 = vld [vmem:[%s165 + $0x8] sm:$0xff]
      %v173 = vld [vmem:[%s165 + $0x10] sm:$0xff]
      %v174 = vld [vmem:[%s165 + $0x18] sm:$0xff]
      %v175 = vld [vmem:[%s165 + $0x20] sm:$0xff]
      %v176 = vld [vmem:[%s165 + $0x28] sm:$0xff]
      %v177 = vld [vmem:[%s165 + $0x30] sm:$0xff]
      %v178 = vld [vmem:[%s165 + $0x38] sm:$0xff]
      %v179 = vadd.f32 %v171, %v172
      %180 = vadd.xlane.f32.xlu0 %v179
      %v181 = vpop.xlane.xlu0 %180
      %v182 = vadd.f32 %v173, %v174
      %183 = vadd.xlane.f32.xlu0 %v182
      %v184 = vpop.xlane.xlu0 %183
      %v185 = vadd.f32 %v175, %v176
      %186 = vadd.xlane.f32.xlu0 %v185
      %v187 = vpop.xlane.xlu0 %186
      %v188 = vadd.f32 %v177, %v178
      %189 = vadd.xlane.f32.xlu0 %v188
      %v190 = vpop.xlane.xlu0 %189
      %v191 = vld [vmem:[%s1] sm:$0xff]
      %v192 = vld [vmem:[%s1 + $0x8] sm:$0xff]
      %v193 = vld [vmem:[%s1 + $0x10] sm:$0xff]
      %v194 = vld [vmem:[%s1 + $0x18] sm:$0xff]
      %v199 = vlaneseq
      %v200 = vand.u32 %v199, 127
      %v201 = vlaneseq
      %v202 = vshrl.u32 %v201, 7
      %v203 = vsub.s32 %v200, %v202
      %v204 = vrot.slane %v181, %v203
      %v205 = vadd.s32 %v200, 4294967288
      %v206 = vlaneseq
      %v207 = vshrl.u32 %v206, 7
      %v208 = vsub.s32 %v205, %v207
      %v209 = vrot.slane %v184, %v208
      %vm210 = vcmask 130112
      %v211 = vsel %vm210, %v209, %v204
      %v212 = vadd.s32 %v200, 4294967280
      %v213 = vlaneseq
      %v214 = vshrl.u32 %v213, 7
      %v215 = vsub.s32 %v212, %v214
      %v216 = vrot.slane %v187, %v215
      %vm217 = vcmask 195712
      %v218 = vsel %vm217, %v216, %v211
      %v219 = vadd.s32 %v200, 4294967272
      %v220 = vlaneseq
      %v221 = vshrl.u32 %v220, 7
      %v222 = vsub.s32 %v219, %v221
      %v223 = vrot.slane %v190, %v222
      %vm224 = vcmask 261312
      %v225 = vsel %vm224, %v223, %v218
      %vm226 = vcmask 261120
      %v227 = vsel %vm226, %v225, 0
      %229 = vmatprep.subr.mxu0 0.0
      %230 = vmatpush1.msra.mxu0 %v191
      %231 = vmatprep.subr.mxu0 0.0
      %232 = vmatpush1.msra.mxu0 %v192
      %233 = vmatprep.subr.mxu0 0.0
      %234 = vmatpush1.msra.mxu0 %v193
      %235 = vmatprep.subr.mxu0 0.0
      %236 = vmatpush1.msra.mxu0 %v194
      %237 = vmatprep.subr.mxu0 0.0
      %238 = vmatpush1.msra.mxu0 0.0
      %239 = vmatprep.subr.mxu0 0.0
      %240 = vmatpush1.msra.mxu0 0.0
      %241 = vmatprep.subr.mxu0 0.0
      %242 = vmatpush1.msra.mxu0 0.0
      %243 = vmatprep.subr.mxu0 0.0
      %244 = vmatpush1.msra.mxu0 0.0
      %245 = vmatprep.subr.mxu0 0.0
      %246 = vmatpush1.msra.mxu0 0.0
      %247 = vmatprep.subr.mxu0 0.0
      %248 = vmatpush1.msra.mxu0 0.0
      %249 = vmatprep.subr.mxu0 0.0
      %250 = vmatpush1.msra.mxu0 0.0
      %251 = vmatprep.subr.mxu0 0.0
      %252 = vmatpush1.msra.mxu0 0.0
      %253 = vmatprep.subr.mxu0 0.0
      %254 = vmatpush1.msra.mxu0 0.0
      %255 = vmatprep.subr.mxu0 0.0
      %256 = vmatpush1.msra.mxu0 0.0
      %257 = vmatprep.subr.mxu0 0.0
      %258 = vmatpush1.msra.mxu0 0.0
      %259 = vmatprep.subr.mxu0 0.0
      %260 = vmatpush1.msra.mxu0 0.0
      %261 = vmatprep.subr.mxu0 0.0
      %262 = vmatpush1.msra.mxu0 0.0
      %263 = vmatprep.subr.mxu0 0.0
      %264 = vmatpush1.msra.mxu0 0.0
      %265 = vmatprep.subr.mxu0 0.0
      %266 = vmatpush1.msra.mxu0 0.0
      %267 = vmatprep.subr.mxu0 0.0
      %268 = vmatpush1.msra.mxu0 0.0
      %269 = vmatprep.subr.mxu0 0.0
      %270 = vmatpush1.msra.mxu0 0.0
      %271 = vmatprep.subr.mxu0 0.0
      %272 = vmatpush1.msra.mxu0 0.0
      %273 = vmatprep.subr.mxu0 0.0
      %274 = vmatpush1.msra.mxu0 0.0
      %275 = vmatprep.subr.mxu0 0.0
      %276 = vmatpush1.msra.mxu0 0.0
      %277 = vmatprep.subr.mxu0 0.0
      %278 = vmatpush1.msra.mxu0 0.0
      %279 = vmatprep.subr.mxu0 0.0
      %280 = vmatpush1.msra.mxu0 0.0
      %281 = vmatprep.subr.mxu0 0.0
      %282 = vmatpush1.msra.mxu0 0.0
      %283 = vmatprep.subr.mxu0 0.0
      %284 = vmatpush1.msra.mxu0 0.0
      %285 = vmatprep.subr.mxu0 0.0
      %286 = vmatpush1.msra.mxu0 0.0
      %287 = vmatprep.subr.mxu0 0.0
      %288 = vmatpush1.msra.mxu0 0.0
      %289 = vmatprep.subr.mxu0 0.0
      %290 = vmatpush1.msra.mxu0 0.0
      %291 = vmatprep.subr.mxu0 0.0
      %292 = vmatpush1.msra.mxu0 0.0
      %293 = vmatprep.mubr.f32.mxu0 0.0
      %294 = vmatmul.mubr.f32.gmra.mrb[0].mxu0 %v227
      %v295 = vpop.f32.mrb[0].mxu0
      %v296 = vadd.f32 0.0, %v295
      %v297 = vpop.f32.mrb[0].mxu0
      %298 = vdwg.mxu0
      %v299 = vmax.f32 %v296, 0.0
      %v300 = vld [vmem:[%s2] sm:$0x3]
      %vm301 = vcmask 15360
      %v303 = vsel %vm301, %v299, 0
      %vm305 = vcmask 1041408
      %v307 = vsel %vm305, %v300, 0
      %309 = vmatprep.subr.mxu0 0.0
      %310 = vmatpush1.msra.mxu0 %v307
      %311 = vmatprep.subr.mxu0 0.0
      %312 = vmatpush1.msra.mxu0 0.0
      %313 = vmatprep.subr.mxu0 0.0
      %314 = vmatpush1.msra.mxu0 0.0
      %315 = vmatprep.subr.mxu0 0.0
      %316 = vmatpush1.msra.mxu0 0.0
      %317 = vmatprep.subr.mxu0 0.0
      %318 = vmatpush1.msra.mxu0 0.0
      %319 = vmatprep.subr.mxu0 0.0
      %320 = vmatpush1.msra.mxu0 0.0
      %321 = vmatprep.subr.mxu0 0.0
      %322 = vmatpush1.msra.mxu0 0.0
      %323 = vmatprep.subr.mxu0 0.0
      %324 = vmatpush1.msra.mxu0 0.0
      %325 = vmatprep.subr.mxu0 0.0
      %326 = vmatpush1.msra.mxu0 0.0
      %327 = vmatprep.subr.mxu0 0.0
      %328 = vmatpush1.msra.mxu0 0.0
      %329 = vmatprep.subr.mxu0 0.0
      %330 = vmatpush1.msra.mxu0 0.0
      %331 = vmatprep.subr.mxu0 0.0
      %332 = vmatpush1.msra.mxu0 0.0
      %333 = vmatprep.subr.mxu0 0.0
      %334 = vmatpush1.msra.mxu0 0.0
      %335 = vmatprep.subr.mxu0 0.0
      %336 = vmatpush1.msra.mxu0 0.0
      %337 = vmatprep.subr.mxu0 0.0
      %338 = vmatpush1.msra.mxu0 0.0
      %339 = vmatprep.subr.mxu0 0.0
      %340 = vmatpush1.msra.mxu0 0.0
      %341 = vmatprep.subr.mxu0 0.0
      %342 = vmatpush1.msra.mxu0 0.0
      %343 = vmatprep.subr.mxu0 0.0
      %344 = vmatpush1.msra.mxu0 0.0
      %345 = vmatprep.subr.mxu0 0.0
      %346 = vmatpush1.msra.mxu0 0.0
      %347 = vmatprep.subr.mxu0 0.0
      %348 = vmatpush1.msra.mxu0 0.0
      %349 = vmatprep.subr.mxu0 0.0
      %350 = vmatpush1.msra.mxu0 0.0
      %351 = vmatprep.subr.mxu0 0.0
      %352 = vmatpush1.msra.mxu0 0.0
      %353 = vmatprep.subr.mxu0 0.0
      %354 = vmatpush1.msra.mxu0 0.0
      %355 = vmatprep.subr.mxu0 0.0
      %356 = vmatpush1.msra.mxu0 0.0
      %357 = vmatprep.subr.mxu0 0.0
      %358 = vmatpush1.msra.mxu0 0.0
      %359 = vmatprep.subr.mxu0 0.0
      %360 = vmatpush1.msra.mxu0 0.0
      %361 = vmatprep.subr.mxu0 0.0
      %362 = vmatpush1.msra.mxu0 0.0
      %363 = vmatprep.subr.mxu0 0.0
      %364 = vmatpush1.msra.mxu0 0.0
      %365 = vmatprep.subr.mxu0 0.0
      %366 = vmatpush1.msra.mxu0 0.0
      %367 = vmatprep.subr.mxu0 0.0
      %368 = vmatpush1.msra.mxu0 0.0
      %369 = vmatprep.subr.mxu0 0.0
      %370 = vmatpush1.msra.mxu0 0.0
      %371 = vmatprep.subr.mxu0 0.0
      %372 = vmatpush1.msra.mxu0 0.0
      %373 = vmatprep.mubr.f32.mxu0 0.0
      %374 = vmatmul.mubr.f32.gmra.mrb[0].mxu0 %v303
      %v375 = vpop.f32.mrb[0].mxu0
      %v376 = vadd.f32 0.0, %v375
      %v377 = vpop.f32.mrb[0].mxu0
      %378 = vdwg.mxu0
      %v379 = vxor.u32 %v376, 2147483648
      %v380 = vmul.f32 %v379, 1.442695
      %v381 = vpow.pop %v380
      %v382 = vadd.f32 %v381, 1.0
      %v383 = vrcp.pop %v382
      %v384 = vmul.f32 1.0, %v383
      %v385 = vlaneseq
      %v386 = vshrl.u32 %v385, 7
      %v387 = vsub.s32 0, %v386
      %v388 = vrot.slane %v384, %v387
      %390 = vbcast.lane.b32.xlu0 %v388, 256
      %v391 = vpop.permute.xlu0 %390
      %s393 = sor.u32 256, 8
      %394 = vbcast.lane.b32.xlu0 %v388, %s393
      %v395 = vpop.permute.xlu0 %394
      %s397 = sor.u32 256, 16
      %398 = vbcast.lane.b32.xlu0 %v388, %s397
      %v399 = vpop.permute.xlu0 %398
      %s401 = sor.u32 256, 24
      %402 = vbcast.lane.b32.xlu0 %v388, %s401
      %v403 = vpop.permute.xlu0 %402
      %v404 = vmul.f32 %v171, %v391
      %v405 = vmul.f32 %v172, %v391
      %v406 = vmul.f32 %v173, %v395
      %v407 = vmul.f32 %v174, %v395
      %v408 = vmul.f32 %v175, %v399
      %v409 = vmul.f32 %v176, %v399
      %v410 = vmul.f32 %v177, %v403
      %v411 = vmul.f32 %v178, %v403
      %412 = vst [vmem:[%s170] sm:$0xff] %v404
      %413 = vst [vmem:[%s170 + $0x8] sm:$0xff] %v405
      %414 = vst [vmem:[%s170 + $0x10] sm:$0xff] %v406
      %415 = vst [vmem:[%s170 + $0x18] sm:$0xff] %v407
      %416 = vst [vmem:[%s170 + $0x20] sm:$0xff] %v408
      %417 = vst [vmem:[%s170 + $0x28] sm:$0xff] %v409
      %418 = vst [vmem:[%s170 + $0x30] sm:$0xff] %v410
      %419 = vst [vmem:[%s170 + $0x38] sm:$0xff] %v411
      %p420 = scmp.lt.s32.totalorder %s14, 1
      %s421 = scalar_select %p420, %s14, 1
      %s422 = smul.addr %s421, 8
      %s423 = smul.addr %s422, 8
      %s424 = scalar_lea.vmem %s3, %s423
      // Predicated region
      $region33: #{channel_attention.1} parent=31 // pred_check
        %p425 = pneg %p100
      $region34: #{channel_attention.1} parent=31 // pred_check_branch
        %427 = sbr.rel (%p425) target = $region36
      $region35: #{channel_attention.1} parent=31 // pred_region
        _
      $region36: #{channel_attention.1} parent=31 // pred_fallthru
        _
    $region32: #{channel_attention.1} parent=5 // pred_fallthru
      _
    %p428 = scmp.le.s32.totalorder 2, %s9
    // Predicated region
    $region37: #{channel_attention.1} parent=5 // pred_check
      %p429 = pneg %p428
    $region38: #{channel_attention.1} parent=5 // pred_check_branch
      %431 = sbr.rel (%p429) target = $region40
    $region39: #{channel_attention.1} parent=5 // pred_region
      %s432 = ssub.s32 %s9, 2
      // Predicated region
      $region41: #{channel_attention.1} parent=39 // pred_check
        %p433 = pneg %p106
      $region42: #{channel_attention.1} parent=39 // pred_check_branch
        %435 = sbr.rel (%p433) target = $region44
      $region43: #{channel_attention.1} parent=39 // pred_region
        %p436 = scmp.lt.s32.totalorder %s15, 1
        %s437 = scalar_select %p436, %s15, 1
        %s438 = smul.addr %s437, 8
        %s439 = smul.addr %s438, 8
        %s440 = scalar_lea.vmem %s3, %s439
      $region44: #{channel_attention.1} parent=39 // pred_fallthru
        _
    $region40: #{channel_attention.1} parent=5 // pred_fallthru
      _
  $region6: #{channel_attention.1} parent=0 // loop_footer
    %s13 = sadd.s32 1, %s9
  $region7: #{channel_attention.1} parent=0 // loop_footer_branch
    %8 = sbr.rel target = $region3
  $region8: #{channel_attention.1} parent=0 // loop_exit
    _

</llo_original>
